<compile_context>
chip_gen: v7x
topology: tpu7x:2x2x1
jax: 0.10.0
libtpu: 0.0.40
codegen_flags: <defaults>
</compile_context>

<pallas_src>
import jax
import jax.numpy as jnp
from jax.experimental import pallas as pl
from jax.experimental.pallas import tpu as pltpu


def _round_up(a, m):
    return ((a + m - 1) // m) * m


def _cdiv(a, b):
    return (a + b - 1) // b


def _tpu_info():
    try:
        return pltpu.get_tpu_info()
    except Exception:
        return None


def _vmem_capacity_bytes():
    info = _tpu_info()
    cap = getattr(info, "vmem_capacity_bytes", None) if info is not None else None
    if cap:
        return int(cap)
    return 128 << 20  # v5e / v6e physical VMEM; conservative default


def _num_tensorcores():
    info = _tpu_info()
    if info is not None:
        for attr in ("num_cores", "core_count", "tensorcore_count", "num_tensorcores"):
            v = getattr(info, attr, None)
            if v:
                return int(v)
    # Heuristic fallback: v7x exposes 64 MiB VMEM per TC and has 2 TCs/chip.
    return 2 if _vmem_capacity_bytes() <= (64 << 20) else 1


# --------------------------------------------------------------------------- #
# Kernel
# --------------------------------------------------------------------------- #
def highway_mlp_kernel(x_ref,
                       w1g_ref, b1g_ref,      # fused [w1 | wg] : (D, 2D), (1, 2D)
                       w2_ref, b2_ref,
                       w3_ref, b3_ref,
                       out_ref):
    x = x_ref[...].astype(jnp.float32)                          # (tb, D)
    D = x.shape[-1]
    wdt = w1g_ref.dtype                                         # bf16 (or f32)

    # Fused first DNN layer + gate logits: one MXU pass with N = 2D.
    y = jnp.dot(x.astype(wdt), w1g_ref[...],
                preferred_element_type=jnp.float32) + b1g_ref[...]   # (tb, 2D) f32
    h = jnp.maximum(y[:, :D], 0.0)                              # DNN layer 1
    logits = y[:, D:]                                           # gate logits

    # DNN layers 2 and 3 (the module's outer ReLU is a no-op after layer-3 ReLU).
    h = jnp.maximum(
        jnp.dot(h.astype(wdt), w2_ref[...],
                preferred_element_type=jnp.float32) + b2_ref[...], 0.0)
    normal = jnp.maximum(
        jnp.dot(h.astype(wdt), w3_ref[...],
                preferred_element_type=jnp.float32) + b3_ref[...], 0.0)

    # Gate: softmax over the feature dim (PyTorch F.softmax dim=1 on 2-D x).
    m = jnp.max(logits, axis=-1, keepdims=True)
    e = jnp.exp(logits - m)
    inv = pl.reciprocal(jnp.sum(e, axis=-1, keepdims=True), approx=True)
    gate = e * inv

    # Highway combine.
    out_ref[...] = (normal * gate + (1.0 - gate) * x).astype(out_ref.dtype)


# --------------------------------------------------------------------------- #
# Wrapper
# --------------------------------------------------------------------------- #
def prepare_params(params, *, use_bf16=True):
    """One-time weight packing: fuse [w1 | wg] into a (D, 2D) matrix and cast
    matmul weights to bf16.  Cache the result and reuse it across calls so the
    hot path performs no per-call HBM pass over the weights."""
    if "w1g" in params:
        return params
    wdt = jnp.bfloat16 if use_bf16 else jnp.float32
    return {
        "w1g": jnp.concatenate([params["w1"], params["wg"]], axis=1).astype(wdt),
        "b1g": jnp.concatenate([params["b1"], params["bg"]], axis=1).astype(jnp.float32),
        "w2": params["w2"].astype(wdt),
        "b2": params["b2"].astype(jnp.float32),
        "w3": params["w3"].astype(wdt),
        "b3": params["b3"].astype(jnp.float32),
    }


def highway_mlp(x, params, *, tb=None, out_dtype=None, use_bf16=True,
                single_buffer_weights=True):
    """x: (B, D) f32.  params: raw f32 dict (init_params) or prepare_params output.
    out_dtype=jnp.bfloat16 cuts output HBM traffic ~25% if downstream allows it."""
    B, D = x.shape
    p = prepare_params(params, use_bf16=use_bf16)     # no-op if already packed
    wdt = p["w1g"].dtype
    out_dtype = jnp.dtype(out_dtype or jnp.float32)

    wbytes = jnp.dtype(wdt).itemsize
    wbuf = 1 if single_buffer_weights else 2
    weight_bytes = wbuf * (4 * D * D * wbytes + 4 * D * 4)

    cap = _vmem_capacity_bytes()                      # per-core physical VMEM
    budget = (cap * 3) // 4                           # leave headroom
    ncores = _num_tensorcores()

    # ---- batch tile: big enough that each step moves ~2 MiB of x/out traffic,
    #      small enough that tiles + temporaries + weights fit the VMEM budget.
    B8 = _round_up(B, 8)
    if tb is None:
        tb = max(256, min(2048, (2 << 20) // max(1, (4 + out_dtype.itemsize) * D)))
    tb = max(8, _round_up(min(tb, B8), 8))
    per_row = 2 * D * 4 + 2 * D * out_dtype.itemsize + 6 * D * 4  # dbuf tiles + temps
    avail = budget - weight_bytes - (2 << 20)
    if avail > per_row * 8:
        tb = min(tb, max(8, (avail // per_row) // 8 * 8))
    tb = max(8, min(tb, B8))
    grid = _cdiv(B8, tb)

    # ---- v7x megacore only: keep both TensorCores busy (grid >= 2, even grid).
    #      On single-TC chips (v5e/v6e) the grid is sequential -> keep tile big.
    if ncores >= 2 and B8 >= 16:
        if grid == 1:
            tb = _round_up(_cdiv(B8, 2), 8)
            grid = _cdiv(B8, tb)
        elif grid % 2 == 1:
            tb2 = _round_up(_cdiv(B8, grid + 1), 8)
            if tb2 >= 8 and _cdiv(B8, tb2) % 2 == 0:
                tb = tb2
                grid = _cdiv(B8, tb)

    vmem_limit = int(min(max(weight_bytes + per_row * tb + (4 << 20), 16 << 20),
                         budget))

    # Block-invariant weights/biases: single-buffer them (index map never changes).
    wmode = pl.Buffered(1) if single_buffer_weights else None

    def wspec(shape):
        if wmode is None:
            return pl.BlockSpec(shape, lambda i: (0, 0))
        return pl.BlockSpec(shape, lambda i: (0, 0), pipeline_mode=wmode)

    x_spec = pl.BlockSpec((tb, D), lambda i: (i, 0))
    out_spec = pl.BlockSpec((tb, D), lambda i: (i, 0))

    # grid = cdiv(B, tb): the ragged last tile is handled by Pallas boundary
    # masking (OOB input rows are garbage but all math is row-independent; OOB
    # output rows are discarded) -> no wrapper pad / slice HBM passes.
    return pl.pallas_call(
        highway_mlp_kernel,
        out_shape=jax.ShapeDtypeStruct((B, D), out_dtype),
        grid_spec=pltpu.PrefetchScalarGridSpec(
            num_scalar_prefetch=0,
            grid=(grid,),
            in_specs=[x_spec,
                      wspec((D, 2 * D)), wspec((1, 2 * D)),
                      wspec((D, D)), wspec((1, D)),
                      wspec((D, D)), wspec((1, D))],
            out_specs=out_spec,
        ),
        compiler_params=pltpu.CompilerParams(
            dimension_semantics=("parallel",),
            vmem_limit_bytes=vmem_limit),
    )(x, p["w1g"], p["b1g"], p["w2"], p["b2"], p["w3"], p["b3"])


# --------------------------------------------------------------------------- #
# Params + pure-JAX reference
# --------------------------------------------------------------------------- #
def init_params(key, D, gate_bias=-3.0):
    ks = jax.random.split(key, 4)
    scale = 1.0 / jnp.sqrt(D)

    def lin(k):
        return jax.random.uniform(k, (D, D), jnp.float32, -scale, scale)

    return {
        "w1": lin(ks[0]), "b1": jnp.zeros((1, D), jnp.float32),
        "w2": lin(ks[1]), "b2": jnp.zeros((1, D), jnp.float32),
        "w3": lin(ks[2]), "b3": jnp.zeros((1, D), jnp.float32),
        "wg": lin(ks[3]),
        # gate_layer.bias.data.fill_(gate_bias)
        "bg": jnp.full((1, D), gate_bias, jnp.float32),
    }


def highway_mlp_ref(x, p, use_bf16=True):
    """Pure-JAX reference (same matmul precision as the kernel)."""
    wdt = jnp.bfloat16 if use_bf16 else jnp.float32

    def dot(a, w):
        return jnp.dot(a.astype(wdt), w.astype(wdt),
                       preferred_element_type=jnp.float32)

    h = jax.nn.relu(dot(x, p["w1"]) + p["b1"])
    h = jax.nn.relu(dot(h, p["w2"]) + p["b2"])
    normal = jax.nn.relu(dot(h, p["w3"]) + p["b3"])
    gate = jax.nn.softmax(dot(x, p["wg"]) + p["bg"], axis=-1)
    return normal * gate + (1.0 - gate) * x


if __name__ == "__main__":
    B, D = 16, 128              # small batch, input_size = 128 (lane-aligned)
    key = jax.random.PRNGKey(0)
    kx, kp = jax.random.split(key)
    x = jax.random.normal(kx, (B, D), jnp.float32)
    params = init_params(kp, D, gate_bias=-3.0)

    packed = prepare_params(params, use_bf16=True)   # pay weight packing once
    out = highway_mlp(x, packed)
    out = jax.block_until_ready(out)

    ref = highway_mlp_ref(x, params, use_bf16=True)
    assert out.shape == (B, D) and out.dtype == jnp.float32
    assert jnp.allclose(out, ref, atol=2e-3, rtol=2e-3), "mismatch vs reference"

    print("KERNEL_OK")
</pallas_src>

<mosaic_0001>
module attributes {stable_mosaic.version = 11 : i64} {
  func.func @highway_mlp_kernel(%arg0: i32, %arg1: memref<16x128xf32, #tpu.memory_space<vmem>>, %arg2: memref<128x256xbf16, #tpu.memory_space<vmem>>, %arg3: memref<1x256xf32, #tpu.memory_space<vmem>>, %arg4: memref<128x128xbf16, #tpu.memory_space<vmem>>, %arg5: memref<1x128xf32, #tpu.memory_space<vmem>>, %arg6: memref<128x128xbf16, #tpu.memory_space<vmem>>, %arg7: memref<1x128xf32, #tpu.memory_space<vmem>>, %arg8: memref<16x128xf32, #tpu.memory_space<vmem>>) attributes {dimension_semantics = [#tpu.dimension_semantics<parallel>], iteration_bounds = array<i64: 1>, scalar_prefetch = 0 : i64, scratch_operands = 0 : i64, tpu.core_type = #tpu.core_type<tc>, window_params = [{transform_indices = @transform_0, window_bounds = array<i64: 16, 128>}, {pipeline_mode = #tpu.pipeline_mode<synchronous>, transform_indices = @transform_1, window_bounds = array<i64: 128, 256>}, {pipeline_mode = #tpu.pipeline_mode<synchronous>, transform_indices = @transform_2, window_bounds = array<i64: 1, 256>}, {pipeline_mode = #tpu.pipeline_mode<synchronous>, transform_indices = @transform_3, window_bounds = array<i64: 128, 128>}, {pipeline_mode = #tpu.pipeline_mode<synchronous>, transform_indices = @transform_4, window_bounds = array<i64: 1, 128>}, {pipeline_mode = #tpu.pipeline_mode<synchronous>, transform_indices = @transform_5, window_bounds = array<i64: 128, 128>}, {pipeline_mode = #tpu.pipeline_mode<synchronous>, transform_indices = @transform_6, window_bounds = array<i64: 1, 128>}, {transform_indices = @transform_7, window_bounds = array<i64: 16, 128>}]} {
    %c0 = arith.constant 0 : index
    %c0_0 = arith.constant 0 : index
    %0 = vector.load %arg1[%c0, %c0_0] : memref<16x128xf32, #tpu.memory_space<vmem>>, vector<16x128xf32>
    %1 = arith.truncf %0 : vector<16x128xf32> to vector<16x128xbf16>
    %c0_1 = arith.constant 0 : index
    %c0_2 = arith.constant 0 : index
    %2 = vector.load %arg2[%c0_1, %c0_2] : memref<128x256xbf16, #tpu.memory_space<vmem>>, vector<128x256xbf16>
    %cst = arith.constant dense<0.000000e+00> : vector<16x256xf32>
    %3 = tpu.matmul %1, %2, %cst {dimension_numbers = #tpu.dot_dimension_numbers<[1], [0], [0], [1], [0, 0, 1, 1], [], []>} : vector<16x128xbf16>, vector<128x256xbf16>, vector<16x256xf32> -> vector<16x256xf32>
    %c0_3 = arith.constant 0 : index
    %c0_4 = arith.constant 0 : index
    %4 = vector.load %arg3[%c0_3, %c0_4] : memref<1x256xf32, #tpu.memory_space<vmem>>, vector<1x256xf32>
    %5 = vector.broadcast %4 : vector<1x256xf32> to vector<16x256xf32>
    %6 = arith.addf %3, %5 : vector<16x256xf32>
    %7 = vector.extract_strided_slice %6 {offsets = [0, 0], sizes = [16, 128], strides = [1, 1]} : vector<16x256xf32> to vector<16x128xf32>
    %cst_5 = arith.constant 0.000000e+00 : f32
    %8 = vector.broadcast %cst_5 : f32 to vector<16x128xf32>
    %9 = arith.maximumf %7, %8 : vector<16x128xf32>
    %10 = vector.extract_strided_slice %6 {offsets = [0, 128], sizes = [16, 128], strides = [1, 1]} : vector<16x256xf32> to vector<16x128xf32>
    %11 = arith.truncf %9 : vector<16x128xf32> to vector<16x128xbf16>
    %c0_6 = arith.constant 0 : index
    %c0_7 = arith.constant 0 : index
    %12 = vector.load %arg4[%c0_6, %c0_7] : memref<128x128xbf16, #tpu.memory_space<vmem>>, vector<128x128xbf16>
    %cst_8 = arith.constant dense<0.000000e+00> : vector<16x128xf32>
    %13 = tpu.matmul %11, %12, %cst_8 {dimension_numbers = #tpu.dot_dimension_numbers<[1], [0], [0], [1], [0, 0, 1, 1], [], []>} : vector<16x128xbf16>, vector<128x128xbf16>, vector<16x128xf32> -> vector<16x128xf32>
    %c0_9 = arith.constant 0 : index
    %c0_10 = arith.constant 0 : index
    %14 = vector.load %arg5[%c0_9, %c0_10] : memref<1x128xf32, #tpu.memory_space<vmem>>, vector<1x128xf32>
    %15 = vector.broadcast %14 : vector<1x128xf32> to vector<16x128xf32>
    %16 = arith.addf %13, %15 : vector<16x128xf32>
    %cst_11 = arith.constant 0.000000e+00 : f32
    %17 = vector.broadcast %cst_11 : f32 to vector<16x128xf32>
    %18 = arith.maximumf %16, %17 : vector<16x128xf32>
    %19 = arith.truncf %18 : vector<16x128xf32> to vector<16x128xbf16>
    %c0_12 = arith.constant 0 : index
    %c0_13 = arith.constant 0 : index
    %20 = vector.load %arg6[%c0_12, %c0_13] : memref<128x128xbf16, #tpu.memory_space<vmem>>, vector<128x128xbf16>
    %cst_14 = arith.constant dense<0.000000e+00> : vector<16x128xf32>
    %21 = tpu.matmul %19, %20, %cst_14 {dimension_numbers = #tpu.dot_dimension_numbers<[1], [0], [0], [1], [0, 0, 1, 1], [], []>} : vector<16x128xbf16>, vector<128x128xbf16>, vector<16x128xf32> -> vector<16x128xf32>
    %c0_15 = arith.constant 0 : index
    %c0_16 = arith.constant 0 : index
    %22 = vector.load %arg7[%c0_15, %c0_16] : memref<1x128xf32, #tpu.memory_space<vmem>>, vector<1x128xf32>
    %23 = vector.broadcast %22 : vector<1x128xf32> to vector<16x128xf32>
    %24 = arith.addf %21, %23 : vector<16x128xf32>
    %cst_17 = arith.constant 0.000000e+00 : f32
    %25 = vector.broadcast %cst_17 : f32 to vector<16x128xf32>
    %26 = arith.maximumf %24, %25 : vector<16x128xf32>
    %cst_18 = arith.constant dense<0xFF800000> : vector<16xf32>
    %27 = vector.multi_reduction <maximumf>, %10, %cst_18 [1] : vector<16x128xf32> to vector<16xf32>
    %28 = vector.shape_cast %27 : vector<16xf32> to vector<16x1xf32>
    %29 = vector.broadcast %28 : vector<16x1xf32> to vector<16x128xf32>
    %30 = arith.subf %10, %29 : vector<16x128xf32>
    %31 = math.exp %30 : vector<16x128xf32>
    %cst_19 = arith.constant dense<0.000000e+00> : vector<16xf32>
    %32 = vector.multi_reduction <add>, %31, %cst_19 [1] : vector<16x128xf32> to vector<16xf32>
    %33 = vector.shape_cast %32 : vector<16xf32> to vector<16x1xf32>
    %34 = tpu.reciprocal %33 {approx = true} : vector<16x1xf32> -> vector<16x1xf32>
    %35 = vector.broadcast %34 : vector<16x1xf32> to vector<16x128xf32>
    %36 = arith.mulf %31, %35 : vector<16x128xf32>
    %37 = arith.mulf %26, %36 : vector<16x128xf32>
    %cst_20 = arith.constant 1.000000e+00 : f32
    %38 = vector.broadcast %cst_20 : f32 to vector<16x128xf32>
    %39 = arith.subf %38, %36 : vector<16x128xf32>
    %40 = arith.mulf %39, %0 : vector<16x128xf32>
    %41 = arith.addf %37, %40 : vector<16x128xf32>
    %c0_21 = arith.constant 0 : index
    %c0_22 = arith.constant 0 : index
    %42 = vector.load %arg8[%c0_21, %c0_22] : memref<16x128xf32, #tpu.memory_space<vmem>>, vector<16x128xf32>
    tpu.vector_store %arg8[%c0_21, %c0_22], %41 {strides = array<i32>} : memref<16x128xf32, #tpu.memory_space<vmem>>, vector<16x128xf32>,
    return
  }
  func.func @transform_0(%arg0: i32) -> (i32, i32) {
    %c0_i32 = arith.constant 0 : i32
    %c0_i32_0 = arith.constant 0 : i32
    return %arg0, %c0_i32 : i32, i32
  }
  func.func @transform_1(%arg0: i32) -> (i32, i32) {
    %c0_i32 = arith.constant 0 : i32
    %c0_i32_0 = arith.constant 0 : i32
    %c0_i32_1 = arith.constant 0 : i32
    return %c0_i32, %c0_i32_0 : i32, i32
  }
  func.func @transform_2(%arg0: i32) -> (i32, i32) {
    %c0_i32 = arith.constant 0 : i32
    %c0_i32_0 = arith.constant 0 : i32
    %c0_i32_1 = arith.constant 0 : i32
    return %c0_i32, %c0_i32_0 : i32, i32
  }
  func.func @transform_3(%arg0: i32) -> (i32, i32) {
    %c0_i32 = arith.constant 0 : i32
    %c0_i32_0 = arith.constant 0 : i32
    %c0_i32_1 = arith.constant 0 : i32
    return %c0_i32, %c0_i32_0 : i32, i32
  }
  func.func @transform_4(%arg0: i32) -> (i32, i32) {
    %c0_i32 = arith.constant 0 : i32
    %c0_i32_0 = arith.constant 0 : i32
    %c0_i32_1 = arith.constant 0 : i32
    return %c0_i32, %c0_i32_0 : i32, i32
  }
  func.func @transform_5(%arg0: i32) -> (i32, i32) {
    %c0_i32 = arith.constant 0 : i32
    %c0_i32_0 = arith.constant 0 : i32
    %c0_i32_1 = arith.constant 0 : i32
    return %c0_i32, %c0_i32_0 : i32, i32
  }
  func.func @transform_6(%arg0: i32) -> (i32, i32) {
    %c0_i32 = arith.constant 0 : i32
    %c0_i32_0 = arith.constant 0 : i32
    %c0_i32_1 = arith.constant 0 : i32
    return %c0_i32, %c0_i32_0 : i32, i32
  }
  func.func @transform_7(%arg0: i32) -> (i32, i32) {
    %c0_i32 = arith.constant 0 : i32
    %c0_i32_0 = arith.constant 0 : i32
    return %arg0, %c0_i32 : i32, i32
  }
}

</mosaic_0001>

<llo_original>
// kernel: tpu_custom_call.1
$region0: #{tpu_custom_call.1}
  #allocation0 [shape = 'u32[]', space=smem, size = 0x4, offset = 0x4, fixed_abs, tag = 'smem constant byte address 0x4 - core index']
  #allocation1 [shape = 'u32[144,128]{1,0:T(1,128)}', space=vmem, size = 0x12000, scoped, tag = 'internal scratch']
  %s0 = inlined_call_operand.hbm [shape: f32[16,128], index: 0, kind: input, shape index: {}]
  %s1 = inlined_call_operand.hbm [shape: bf16[128,256], index: 1, kind: input, shape index: {}]
  %s2 = inlined_call_operand.vmem [shape: f32[1,256], index: 2, kind: input, shape index: {}]
  %s3 = inlined_call_operand.hbm [shape: bf16[128,128], index: 3, kind: input, shape index: {}]
  %s4 = inlined_call_operand.vmem [shape: f32[1,128], index: 4, kind: input, shape index: {}]
  %s5 = inlined_call_operand.hbm [shape: bf16[128,128], index: 5, kind: input, shape index: {}]
  %s6 = inlined_call_operand.vmem [shape: f32[1,128], index: 6, kind: input, shape index: {}]
  %s7 = inlined_call_operand.hbm [shape: f32[16,128], index: 7, kind: output, shape index: {}]
  %s8 = sld [smem:[#allocation0]]
  $region54: #{tpu_custom_call.1} parent=0
    _
  %s10 = ssub.s32 1, %s8
  %s11 = scalar_select 0, %s10, %s8
  $region1: #{tpu_custom_call.1} parent=0
    #allocation2 [shape = 'u8[8192]{0}', space=vmem, size = 0x2000, scoped, tag = 'input window, operand 0, single buffered']
    #allocation3 [shape = 's32[1]{0}', space=sflag, size = 0x4, scoped, tag = 'scoped memory for tpu_custom_call.1']
    #allocation4 [shape = 's32[1]{0}', space=sflag, size = 0x4, scoped, tag = 'scoped memory for tpu_custom_call.1']
    #allocation5 [shape = 'u8[65536]{0}', space=vmem, size = 0x10000, scoped, tag = 'input window, operand 1, single buffered']
    #allocation6 [shape = 's32[1]{0}', space=sflag, size = 0x4, scoped, tag = 'scoped memory for tpu_custom_call.1']
    #allocation7 [shape = 'u8[32768]{0}', space=vmem, size = 0x8000, scoped, tag = 'input window, operand 3, single buffered']
    #allocation8 [shape = 'u8[32768]{0}', space=vmem, size = 0x8000, scoped, tag = 'input window, operand 5, single buffered']
    #allocation9 [shape = 's32[1]{0}', space=sflag, size = 0x4, scoped, tag = 'scoped memory for tpu_custom_call.1']
    #allocation10 [shape = 'u8[8192]{0}', space=vmem, size = 0x2000, scoped, tag = 'output window, operand 0, single buffered']
    %12 = vsyncpa [#allocation3], 0
    %13 = vsyncpa [#allocation6], 0
    %14 = vsyncpa [#allocation9], 0
    %15 = vsyncpa [#allocation4], 0
    // Predicated region
    $region2: #{tpu_custom_call.1} parent=1 // pred_check
      _
    $region3: #{tpu_custom_call.1} parent=1 // pred_check_branch
      %17 = sbr.rel (0) target = $region5
    $region4: #{tpu_custom_call.1} parent=1 // pred_region
      %s19 = ssub.s32 256, 256
      %20 = vsyncadd [#allocation3], %s19
      %s21 = sshll.u32 [#allocation2], 4
      %s22 = int_to_ptr.vmem [resolvable:$true] %s21
      %27 = dma.hbm_to_vmem [thread:$0]  %s0, 256, %s22, [#allocation3], 128, 128, 8
    $region5: #{tpu_custom_call.1} parent=1 // pred_fallthru
      _
    // Predicated region
    $region6: #{tpu_custom_call.1} parent=1 // pred_check
      _
    $region7: #{tpu_custom_call.1} parent=1 // pred_check_branch
      %29 = sbr.rel (0) target = $region9
    $region8: #{tpu_custom_call.1} parent=1 // pred_region
      %s31 = ssub.s32 2048, 2048
      %32 = vsyncadd [#allocation6], %s31
      %s33 = sshll.u32 [#allocation5], 4
      %s34 = int_to_ptr.vmem [resolvable:$true] %s33
      %39 = dma.hbm_to_vmem [thread:$0]  %s1, 2048, %s34, [#allocation6], 128, 128, 8
    $region9: #{tpu_custom_call.1} parent=1 // pred_fallthru
      _
    // Predicated region
    $region10: #{tpu_custom_call.1} parent=1 // pred_check
      _
    $region11: #{tpu_custom_call.1} parent=1 // pred_check_branch
      %41 = sbr.rel (0) target = $region13
    $region12: #{tpu_custom_call.1} parent=1 // pred_region
      _
    $region13: #{tpu_custom_call.1} parent=1 // pred_fallthru
      _
    // Predicated region
    $region14: #{tpu_custom_call.1} parent=1 // pred_check
      _
    $region15: #{tpu_custom_call.1} parent=1 // pred_check_branch
      %43 = sbr.rel (0) target = $region17
    $region16: #{tpu_custom_call.1} parent=1 // pred_region
      %s45 = ssub.s32 1024, 1024
      %46 = vsyncadd [#allocation6], %s45
      %s47 = sshll.u32 [#allocation7], 4
      %s48 = int_to_ptr.vmem [resolvable:$true] %s47
      %53 = dma.hbm_to_vmem [thread:$0]  %s3, 1024, %s48, [#allocation6], 64, 64, 4
    $region17: #{tpu_custom_call.1} parent=1 // pred_fallthru
      _
    // Predicated region
    $region18: #{tpu_custom_call.1} parent=1 // pred_check
      _
    $region19: #{tpu_custom_call.1} parent=1 // pred_check_branch
      %55 = sbr.rel (0) target = $region21
    $region20: #{tpu_custom_call.1} parent=1 // pred_region
      _
    $region21: #{tpu_custom_call.1} parent=1 // pred_fallthru
      _
    // Predicated region
    $region22: #{tpu_custom_call.1} parent=1 // pred_check
      _
    $region23: #{tpu_custom_call.1} parent=1 // pred_check_branch
      %57 = sbr.rel (0) target = $region25
    $region24: #{tpu_custom_call.1} parent=1 // pred_region
      %s59 = ssub.s32 1024, 1024
      %60 = vsyncadd [#allocation9], %s59
      %s61 = sshll.u32 [#allocation8], 4
      %s62 = int_to_ptr.vmem [resolvable:$true] %s61
      %67 = dma.hbm_to_vmem [thread:$0]  %s5, 1024, %s62, [#allocation9], 64, 64, 4
    $region25: #{tpu_custom_call.1} parent=1 // pred_fallthru
      _
    // Predicated region
    $region26: #{tpu_custom_call.1} parent=1 // pred_check
      _
    $region27: #{tpu_custom_call.1} parent=1 // pred_check_branch
      %69 = sbr.rel (0) target = $region29
    $region28: #{tpu_custom_call.1} parent=1 // pred_region
      _
    $region29: #{tpu_custom_call.1} parent=1 // pred_fallthru
      _
    // Predicated region
    $region30: #{tpu_custom_call.1} parent=1 // pred_check
      _
    $region31: #{tpu_custom_call.1} parent=1 // pred_check_branch
      %71 = sbr.rel (0) target = $region33
    $region32: #{tpu_custom_call.1} parent=1 // pred_region
      %72 = dma.done [#allocation3], 256
    $region33: #{tpu_custom_call.1} parent=1 // pred_fallthru
      _
    // Predicated region
    $region34: #{tpu_custom_call.1} parent=1 // pred_check
      _
    $region35: #{tpu_custom_call.1} parent=1 // pred_check_branch
      %74 = sbr.rel (0) target = $region37
    $region36: #{tpu_custom_call.1} parent=1 // pred_region
      %75 = dma.done [#allocation6], 2048
    $region37: #{tpu_custom_call.1} parent=1 // pred_fallthru
      _
    // Predicated region
    $region38: #{tpu_custom_call.1} parent=1 // pred_check
      _
    $region39: #{tpu_custom_call.1} parent=1 // pred_check_branch
      %77 = sbr.rel (0) target = $region41
    $region40: #{tpu_custom_call.1} parent=1 // pred_region
      %78 = dma.done [#allocation6], 1024
    $region41: #{tpu_custom_call.1} parent=1 // pred_fallthru
      _
    // Predicated region
    $region42: #{tpu_custom_call.1} parent=1 // pred_check
      _
    $region43: #{tpu_custom_call.1} parent=1 // pred_check_branch
      %80 = sbr.rel (0) target = $region45
    $region44: #{tpu_custom_call.1} parent=1 // pred_region
      %81 = dma.done [#allocation9], 1024
    $region45: #{tpu_custom_call.1} parent=1 // pred_fallthru
      _
    %v83 = vld [vmem:[#allocation2] sm:$0xff]
    %v84 = vld [vmem:[#allocation2 + $0x8] sm:$0xff]
    %v85 = vpack.c.bf16 %v84, %v83
    %v86 = vld [vmem:[#allocation5] sm:$0xff]
    %v87 = vld [vmem:[#allocation5 + $0x8] sm:$0xff]
    %v88 = vld [vmem:[#allocation5 + $0x10] sm:$0xff]
    %v89 = vld [vmem:[#allocation5 + $0x18] sm:$0xff]
    %v90 = vld [vmem:[#allocation5 + $0x20] sm:$0xff]
    %v91 = vld [vmem:[#allocation5 + $0x28] sm:$0xff]
    %v92 = vld [vmem:[#allocation5 + $0x30] sm:$0xff]
    %v93 = vld [vmem:[#allocation5 + $0x38] sm:$0xff]
    %v94 = vld [vmem:[#allocation5 + $0x40] sm:$0xff]
    %v95 = vld [vmem:[#allocation5 + $0x48] sm:$0xff]
    %v96 = vld [vmem:[#allocation5 + $0x50] sm:$0xff]
    %v97 = vld [vmem:[#allocation5 + $0x58] sm:$0xff]
    %v98 = vld [vmem:[#allocation5 + $0x60] sm:$0xff]
    %v99 = vld [vmem:[#allocation5 + $0x68] sm:$0xff]
    %v100 = vld [vmem:[#allocation5 + $0x70] sm:$0xff]
    %v101 = vld [vmem:[#allocation5 + $0x78] sm:$0xff]
    %v102 = vld [vmem:[%s2] sm:$0x3]
    %v104 = vlaneseq
    %v105 = vshrl.u32 %v104, 7
    %v106 = vsub.s32 0, %v105
    %v107 = vrot.slane %v102, %v106
    %v108 = vlaneseq
    %v109 = vshrl.u32 %v108, 7
    %v110 = vsub.s32 1, %v109
    %v111 = vrot.slane %v102, %v110
    %v130 = vunpack.c.l.b16 %v86
    %v131 = vunpack.c.h.b16 %v86
    %v132 = vunpack.c.l.b16 %v87
    %v133 = vunpack.c.h.b16 %v87
    %v134 = vunpack.c.l.b16 %v88
    %v135 = vunpack.c.h.b16 %v88
    %v136 = vunpack.c.l.b16 %v89
    %v137 = vunpack.c.h.b16 %v89
    %v138 = vunpack.c.l.b16 %v90
    %v139 = vunpack.c.h.b16 %v90
    %v140 = vunpack.c.l.b16 %v91
    %v141 = vunpack.c.h.b16 %v91
    %v142 = vunpack.c.l.b16 %v92
    %v143 = vunpack.c.h.b16 %v92
    %v144 = vunpack.c.l.b16 %v93
    %v145 = vunpack.c.h.b16 %v93
    %v146 = vunpack.c.l.b16 %v94
    %v147 = vunpack.c.h.b16 %v94
    %v148 = vunpack.c.l.b16 %v95
    %v149 = vunpack.c.h.b16 %v95
    %v150 = vunpack.c.l.b16 %v96
    %v151 = vunpack.c.h.b16 %v96
    %v152 = vunpack.c.l.b16 %v97
    %v153 = vunpack.c.h.b16 %v97
    %v154 = vunpack.c.l.b16 %v98
    %v155 = vunpack.c.h.b16 %v98
    %v156 = vunpack.c.l.b16 %v99
    %v157 = vunpack.c.h.b16 %v99
    %v158 = vunpack.c.l.b16 %v100
    %v159 = vunpack.c.h.b16 %v100
    %v160 = vunpack.c.l.b16 %v101
    %v161 = vunpack.c.h.b16 %v101
    %v162 = vpack.c.b16 %v132, %v130
    %v163 = vpack.c.b16 %v133, %v131
    %v164 = vpack.c.b16 %v136, %v134
    %v165 = vpack.c.b16 %v137, %v135
    %v166 = vpack.c.b16 %v140, %v138
    %v167 = vpack.c.b16 %v141, %v139
    %v168 = vpack.c.b16 %v144, %v142
    %v169 = vpack.c.b16 %v145, %v143
    %v170 = vpack.c.b16 %v148, %v146
    %v171 = vpack.c.b16 %v149, %v147
    %v172 = vpack.c.b16 %v152, %v150
    %v173 = vpack.c.b16 %v153, %v151
    %v174 = vpack.c.b16 %v156, %v154
    %v175 = vpack.c.b16 %v157, %v155
    %v176 = vpack.c.b16 %v160, %v158
    %v177 = vpack.c.b16 %v161, %v159
    %194 = vmatprep.subr.bf16.mxu0 %v163
    %195 = vmatpush1.bf16.msra.mxu0 %v162
    %196 = vmatprep.subr.bf16.mxu0 %v165
    %197 = vmatpush1.bf16.msra.mxu0 %v164
    %198 = vmatprep.subr.bf16.mxu0 %v167
    %199 = vmatpush1.bf16.msra.mxu0 %v166
    %200 = vmatprep.subr.bf16.mxu0 %v169
    %201 = vmatpush1.bf16.msra.mxu0 %v168
    %202 = vmatprep.subr.bf16.mxu0 %v171
    %203 = vmatpush1.bf16.msra.mxu0 %v170
    %204 = vmatprep.subr.bf16.mxu0 %v173
    %205 = vmatpush1.bf16.msra.mxu0 %v172
    %206 = vmatprep.subr.bf16.mxu0 %v175
    %207 = vmatpush1.bf16.msra.mxu0 %v174
    %208 = vmatprep.subr.bf16.mxu0 %v177
    %209 = vmatpush1.bf16.msra.mxu0 %v176
    %210 = vmatprep.subr.bf16.mxu0 0
    %211 = vmatpush1.bf16.msra.mxu0 0
    %212 = vmatprep.subr.bf16.mxu0 0
    %213 = vmatpush1.bf16.msra.mxu0 0
    %214 = vmatprep.subr.bf16.mxu0 0
    %215 = vmatpush1.bf16.msra.mxu0 0
    %216 = vmatprep.subr.bf16.mxu0 0
    %217 = vmatpush1.bf16.msra.mxu0 0
    %218 = vmatprep.subr.bf16.mxu0 0
    %219 = vmatpush1.bf16.msra.mxu0 0
    %220 = vmatprep.subr.bf16.mxu0 0
    %221 = vmatpush1.bf16.msra.mxu0 0
    %222 = vmatprep.subr.bf16.mxu0 0
    %223 = vmatpush1.bf16.msra.mxu0 0
    %224 = vmatprep.subr.bf16.mxu0 0
    %225 = vmatpush1.bf16.msra.mxu0 0
    %226 = vmatprep.mubr.bf16.mxu0 0
    %227 = vmatmul.mubr.bf16.gmra.mrb[0].mxu0 %v85
    %v228 = vpop.f32.mrb[0].mxu0
    %v229 = vadd.f32 %v107, %v228
    %v230 = vpop.f32.mrb[0].mxu0
    %v231 = vadd.f32 %v111, %v230
    %v232 = vpop.f32.mrb[0].mxu0
    %v233 = vadd.f32 %v107, %v232
    %v234 = vpop.f32.mrb[0].mxu0
    %v235 = vadd.f32 %v111, %v234
    %236 = vdwg.mxu0
    %v237 = vmax.f32 %v229, 0.0
    %v238 = vmax.f32 %v233, 0.0
    %v239 = vpack.c.bf16 %v238, %v237
    %v240 = vld [vmem:[#allocation7] sm:$0xf]
    %v241 = vld [vmem:[#allocation7 + $0x4] sm:$0xf]
    %v242 = vld [vmem:[#allocation7 + $0x8] sm:$0xf]
    %v243 = vld [vmem:[#allocation7 + $0xc] sm:$0xf]
    %v244 = vld [vmem:[#allocation7 + $0x10] sm:$0xf]
    %v245 = vld [vmem:[#allocation7 + $0x14] sm:$0xf]
    %v246 = vld [vmem:[#allocation7 + $0x18] sm:$0xf]
    %v247 = vld [vmem:[#allocation7 + $0x1c] sm:$0xf]
    %v248 = vld [vmem:[#allocation7 + $0x20] sm:$0xf]
    %v249 = vld [vmem:[#allocation7 + $0x24] sm:$0xf]
    %v250 = vld [vmem:[#allocation7 + $0x28] sm:$0xf]
    %v251 = vld [vmem:[#allocation7 + $0x2c] sm:$0xf]
    %v252 = vld [vmem:[#allocation7 + $0x30] sm:$0xf]
    %v253 = vld [vmem:[#allocation7 + $0x34] sm:$0xf]
    %v254 = vld [vmem:[#allocation7 + $0x38] sm:$0xf]
    %v255 = vld [vmem:[#allocation7 + $0x3c] sm:$0xf]
    %v256 = vld [vmem:[%s4] sm:$0x1]
    %v258 = vlaneseq
    %v259 = vshrl.u32 %v258, 7
    %v260 = vsub.s32 0, %v259
    %v261 = vrot.slane %v256, %v260
    %v279 = vunpack.c.l.b16 %v240
    %v280 = vunpack.c.l.b16 %v241
    %v281 = vunpack.c.l.b16 %v242
    %v282 = vunpack.c.l.b16 %v243
    %v283 = vunpack.c.l.b16 %v244
    %v284 = vunpack.c.l.b16 %v245
    %v285 = vunpack.c.l.b16 %v246
    %v286 = vunpack.c.l.b16 %v247
    %v287 = vunpack.c.l.b16 %v248
    %v288 = vunpack.c.l.b16 %v249
    %v289 = vunpack.c.l.b16 %v250
    %v290 = vunpack.c.l.b16 %v251
    %v291 = vunpack.c.l.b16 %v252
    %v292 = vunpack.c.l.b16 %v253
    %v293 = vunpack.c.l.b16 %v254
    %v294 = vunpack.c.l.b16 %v255
    %v295 = vpack.c.b16 %v280, %v279
    %v296 = vpack.c.b16 %v282, %v281
    %v297 = vpack.c.b16 %v284, %v283
    %v298 = vpack.c.b16 %v286, %v285
    %v299 = vpack.c.b16 %v288, %v287
    %v300 = vpack.c.b16 %v290, %v289
    %v301 = vpack.c.b16 %v292, %v291
    %v302 = vpack.c.b16 %v294, %v293
    %311 = vmatprep.subr.bf16.mxu0 0
    %312 = vmatpush1.bf16.msra.mxu0 %v295
    %313 = vmatprep.subr.bf16.mxu0 0
    %314 = vmatpush1.bf16.msra.mxu0 %v296
    %315 = vmatprep.subr.bf16.mxu0 0
    %316 = vmatpush1.bf16.msra.mxu0 %v297
    %317 = vmatprep.subr.bf16.mxu0 0
    %318 = vmatpush1.bf16.msra.mxu0 %v298
    %319 = vmatprep.subr.bf16.mxu0 0
    %320 = vmatpush1.bf16.msra.mxu0 %v299
    %321 = vmatprep.subr.bf16.mxu0 0
    %322 = vmatpush1.bf16.msra.mxu0 %v300
    %323 = vmatprep.subr.bf16.mxu0 0
    %324 = vmatpush1.bf16.msra.mxu0 %v301
    %325 = vmatprep.subr.bf16.mxu0 0
    %326 = vmatpush1.bf16.msra.mxu0 %v302
    %327 = vmatprep.subr.bf16.mxu0 0
    %328 = vmatpush1.bf16.msra.mxu0 0
    %329 = vmatprep.subr.bf16.mxu0 0
    %330 = vmatpush1.bf16.msra.mxu0 0
    %331 = vmatprep.subr.bf16.mxu0 0
    %332 = vmatpush1.bf16.msra.mxu0 0
    %333 = vmatprep.subr.bf16.mxu0 0
    %334 = vmatpush1.bf16.msra.mxu0 0
    %335 = vmatprep.subr.bf16.mxu0 0
    %336 = vmatpush1.bf16.msra.mxu0 0
    %337 = vmatprep.subr.bf16.mxu0 0
    %338 = vmatpush1.bf16.msra.mxu0 0
    %339 = vmatprep.subr.bf16.mxu0 0
    %340 = vmatpush1.bf16.msra.mxu0 0
    %341 = vmatprep.subr.bf16.mxu0 0
    %342 = vmatpush1.bf16.msra.mxu0 0
    %343 = vmatprep.mubr.bf16.mxu0 0
    %344 = vmatmul.mubr.bf16.gmra.mrb[0].mxu0 %v239
    %v345 = vpop.f32.mrb[0].mxu0
    %v346 = vadd.f32 %v261, %v345
    %v347 = vpop.f32.mrb[0].mxu0
    %v348 = vpop.f32.mrb[0].mxu0
    %v349 = vadd.f32 %v261, %v348
    %v350 = vpop.f32.mrb[0].mxu0
    %351 = vdwg.mxu0
    %v352 = vmax.f32 %v346, 0.0
    %v353 = vmax.f32 %v349, 0.0
    %v354 = vpack.c.bf16 %v353, %v352
    %v355 = vld [vmem:[#allocation8] sm:$0xf]
    %v356 = vld [vmem:[#allocation8 + $0x4] sm:$0xf]
    %v357 = vld [vmem:[#allocation8 + $0x8] sm:$0xf]
    %v358 = vld [vmem:[#allocation8 + $0xc] sm:$0xf]
    %v359 = vld [vmem:[#allocation8 + $0x10] sm:$0xf]
    %v360 = vld [vmem:[#allocation8 + $0x14] sm:$0xf]
    %v361 = vld [vmem:[#allocation8 + $0x18] sm:$0xf]
    %v362 = vld [vmem:[#allocation8 + $0x1c] sm:$0xf]
    %v363 = vld [vmem:[#allocation8 + $0x20] sm:$0xf]
    %v364 = vld [vmem:[#allocation8 + $0x24] sm:$0xf]
    %v365 = vld [vmem:[#allocation8 + $0x28] sm:$0xf]
    %v366 = vld [vmem:[#allocation8 + $0x2c] sm:$0xf]
    %v367 = vld [vmem:[#allocation8 + $0x30] sm:$0xf]
    %v368 = vld [vmem:[#allocation8 + $0x34] sm:$0xf]
    %v369 = vld [vmem:[#allocation8 + $0x38] sm:$0xf]
    %v370 = vld [vmem:[#allocation8 + $0x3c] sm:$0xf]
    %v371 = vld [vmem:[%s6] sm:$0x1]
    %v373 = vlaneseq
    %v374 = vshrl.u32 %v373, 7
    %v375 = vsub.s32 0, %v374
    %v376 = vrot.slane %v371, %v375
    %v394 = vunpack.c.l.b16 %v355
    %v395 = vunpack.c.l.b16 %v356
    %v396 = vunpack.c.l.b16 %v357
    %v397 = vunpack.c.l.b16 %v358
    %v398 = vunpack.c.l.b16 %v359
    %v399 = vunpack.c.l.b16 %v360
    %v400 = vunpack.c.l.b16 %v361
    %v401 = vunpack.c.l.b16 %v362
    %v402 = vunpack.c.l.b16 %v363
    %v403 = vunpack.c.l.b16 %v364
    %v404 = vunpack.c.l.b16 %v365
    %v405 = vunpack.c.l.b16 %v366
    %v406 = vunpack.c.l.b16 %v367
    %v407 = vunpack.c.l.b16 %v368
    %v408 = vunpack.c.l.b16 %v369
    %v409 = vunpack.c.l.b16 %v370
    %v410 = vpack.c.b16 %v395, %v394
    %v411 = vpack.c.b16 %v397, %v396
    %v412 = vpack.c.b16 %v399, %v398
    %v413 = vpack.c.b16 %v401, %v400
    %v414 = vpack.c.b16 %v403, %v402
    %v415 = vpack.c.b16 %v405, %v404
    %v416 = vpack.c.b16 %v407, %v406
    %v417 = vpack.c.b16 %v409, %v408
    %426 = vmatprep.subr.bf16.mxu0 0
    %427 = vmatpush1.bf16.msra.mxu0 %v410
    %428 = vmatprep.subr.bf16.mxu0 0
    %429 = vmatpush1.bf16.msra.mxu0 %v411
    %430 = vmatprep.subr.bf16.mxu0 0
    %431 = vmatpush1.bf16.msra.mxu0 %v412
    %432 = vmatprep.subr.bf16.mxu0 0
    %433 = vmatpush1.bf16.msra.mxu0 %v413
    %434 = vmatprep.subr.bf16.mxu0 0
    %435 = vmatpush1.bf16.msra.mxu0 %v414
    %436 = vmatprep.subr.bf16.mxu0 0
    %437 = vmatpush1.bf16.msra.mxu0 %v415
    %438 = vmatprep.subr.bf16.mxu0 0
    %439 = vmatpush1.bf16.msra.mxu0 %v416
    %440 = vmatprep.subr.bf16.mxu0 0
    %441 = vmatpush1.bf16.msra.mxu0 %v417
    %442 = vmatprep.subr.bf16.mxu0 0
    %443 = vmatpush1.bf16.msra.mxu0 0
    %444 = vmatprep.subr.bf16.mxu0 0
    %445 = vmatpush1.bf16.msra.mxu0 0
    %446 = vmatprep.subr.bf16.mxu0 0
    %447 = vmatpush1.bf16.msra.mxu0 0
    %448 = vmatprep.subr.bf16.mxu0 0
    %449 = vmatpush1.bf16.msra.mxu0 0
    %450 = vmatprep.subr.bf16.mxu0 0
    %451 = vmatpush1.bf16.msra.mxu0 0
    %452 = vmatprep.subr.bf16.mxu0 0
    %453 = vmatpush1.bf16.msra.mxu0 0
    %454 = vmatprep.subr.bf16.mxu0 0
    %455 = vmatpush1.bf16.msra.mxu0 0
    %456 = vmatprep.subr.bf16.mxu0 0
    %457 = vmatpush1.bf16.msra.mxu0 0
    %458 = vmatprep.mubr.bf16.mxu0 0
    %459 = vmatmul.mubr.bf16.gmra.mrb[0].mxu0 %v354
    %v460 = vpop.f32.mrb[0].mxu0
    %v461 = vadd.f32 %v376, %v460
    %v462 = vpop.f32.mrb[0].mxu0
    %v463 = vpop.f32.mrb[0].mxu0
    %v464 = vadd.f32 %v376, %v463
    %v465 = vpop.f32.mrb[0].mxu0
    %466 = vdwg.mxu0
    %v467 = vmax.f32 %v461, 0.0
    %v468 = vmax.f32 %v464, 0.0
    %469 = vmax.xlane.f32.xlu0 %v231
    %v470 = vpop.xlane.xlu0 %469
    %471 = vmax.xlane.f32.xlu0 %v235
    %v472 = vpop.xlane.xlu0 %471
    %v473 = vsub.f32 %v231, %v470
    %v474 = vsub.f32 %v235, %v472
    %v475 = vmul.f32 %v473, 1.442695
    %v476 = vpow.pop %v475
    %v477 = vmul.f32 %v474, 1.442695
    %v478 = vpow.pop %v477
    %479 = vadd.xlane.f32.xlu0 %v476
    %v480 = vpop.xlane.xlu0 %479
    %481 = vadd.xlane.f32.xlu0 %v478
    %v482 = vpop.xlane.xlu0 %481
    %v483 = vrcp.pop %v480
    %v484 = vrcp.pop %v482
    %v485 = vmul.f32 %v476, %v483
    %v486 = vmul.f32 %v478, %v484
    %v487 = vmul.f32 %v467, %v485
    %v488 = vmul.f32 %v468, %v486
    %v489 = vsub.f32 1.0, %v485
    %v490 = vsub.f32 1.0, %v486
    %v491 = vmul.f32 %v489, %v83
    %v492 = vmul.f32 %v490, %v84
    %v493 = vadd.f32 %v487, %v491
    %v494 = vadd.f32 %v488, %v492
    %495 = vst [vmem:[#allocation10] sm:$0xff] %v493
    %496 = vst [vmem:[#allocation10 + $0x8] sm:$0xff] %v494
    // Predicated region
    $region46: #{tpu_custom_call.1} parent=1 // pred_check
      _
    $region47: #{tpu_custom_call.1} parent=1 // pred_check_branch
      %498 = sbr.rel (0) target = $region49
    $region48: #{tpu_custom_call.1} parent=1 // pred_region
      %s500 = ssub.s32 256, 256
      %501 = vsyncadd [#allocation4], %s500
      %s502 = sshll.u32 [#allocation10], 4
      %s503 = int_to_ptr.vmem [resolvable:$true] %s502
      %508 = dma.vmem_to_hbm [thread:$0]  %s503, 256, %s7, [#allocation4], 128, 128, 8
    $region49: #{tpu_custom_call.1} parent=1 // pred_fallthru
      _
    // Predicated region
    $region50: #{tpu_custom_call.1} parent=1 // pred_check
      _
    $region51: #{tpu_custom_call.1} parent=1 // pred_check_branch
      %510 = sbr.rel (0) target = $region53
    $region52: #{tpu_custom_call.1} parent=1 // pred_region
      %511 = dma.done [#allocation4], 256
    $region53: #{tpu_custom_call.1} parent=1 // pred_fallthru
      _
    %512 = vsyncpa [#allocation3], 1
    %513 = vsyncpa [#allocation6], 1
    %514 = vsyncpa [#allocation9], 1
    %515 = vsyncpa [#allocation4], 1

</llo_original>
